<compile_context>
chip_gen: v7x
topology: tpu7x:2x2x1
jax: 0.10.0
libtpu: 0.0.40
codegen_flags: <defaults>
</compile_context>

<pallas_src>
import jax
import jax.numpy as jnp
from jax.experimental import pallas as pl
from jax.experimental.pallas import tpu as pltpu


MAX_TILE_B = 4096   # per-tile VMEM cost is tiny (tile_b*(D+1)*2B*2 bufs), fits v7x's 64 MiB
H_PAD = 128         # hidden dim padded to a full lane width


def _pick_tile_b(batch, max_tile=MAX_TILE_B):
    # Aim for >= 2 balanced tiles (feeds both v7x TensorCores) while keeping tiles
    # as large as possible.  tile_b is a multiple of 128 so the (1, tile_b) output
    # store stays a full-lane unmasked vst (also covers the 8-sublane x constraint).
    half = -(-batch // 2)
    tile = -(-half // 256) * 256
    return int(min(max_tile, max(256, tile)))


def mlp_kernel(x_ref, w1_ref, b1_ref, w2_ref, b2_ref, o_ref):
    # fc1 on the MXU: (tile_b, D) bf16 @ (D, H_PAD) bf16 -> f32 accumulate.
    h = jnp.dot(x_ref[...], w1_ref[...], preferred_element_type=jnp.float32)
    # bias + ReLU on the VPU; zero-padded hidden columns stay exactly 0.
    h = jnp.maximum(h + b1_ref[...], 0.0)
    # TODO(synk): dropout is identity (eval-mode nn.Dropout); training-mode dropout
    # would need pltpu.prng_seed + pltpu.stateful_bernoulli for the mask.
    # fc2 as (1, H_PAD) contracted with (tile_b, H_PAD) over the hidden dim
    # -> (1, tile_b): lane-dense row, so the store is an unmasked full-lane write
    # instead of (tile_b, 1) masked partial stores.
    ot = jax.lax.dot_general(
        w2_ref[...], h,
        dimension_numbers=(((1,), (1,)), ((), ())),
        preferred_element_type=jnp.float32,
    )
    o_ref[...] = ot + b2_ref[0, 0]   # b2 is a scalar held in SMEM


def regression_nn_forward(x, w1, b1, w2, b2, *, tile_b=None):
    """x: (B, D) f32; w1: (D, H); b1: (1, H); w2: (H, 1); b2: (1, 1) -> (B, 1)."""
    B, D = x.shape
    H = w1.shape[1]

    # ---- layout plumbing (weights are tiny and VMEM-resident across tiles) ----
    hp = max(H_PAD, pl.cdiv(H, 128) * 128)                    # hidden -> full lanes
    w1p = jnp.zeros((D, hp), jnp.bfloat16).at[:, :H].set(w1.astype(jnp.bfloat16))
    b1p = jnp.zeros((1, hp), jnp.float32).at[:, :H].set(b1)
    w2p = jnp.zeros((1, hp), jnp.float32).at[:, :H].set(w2.reshape(1, H))

    if tile_b is None:
        tile_b = _pick_tile_b(B)
    n_tiles = pl.cdiv(B, tile_b)
    b_pad = n_tiles * tile_b

    # bf16 streamed operand: halves x HBM traffic; MXU accumulates in f32.
    x_bf = x.astype(jnp.bfloat16)

    flops = 2 * B * D * hp + 2 * B * hp
    bytes_accessed = (x_bf.size * 2 + b_pad * 4
                      + w1p.size * 2 + b1p.size * 4 + w2p.size * 4 + 4)

    out_row = pl.pallas_call(
        mlp_kernel,
        out_shape=jax.ShapeDtypeStruct((1, b_pad), jnp.float32),
        grid=(n_tiles,),
        in_specs=[
            pl.BlockSpec((tile_b, D), lambda i: (i, 0)),          # x: streamed per tile (ragged last block OK)
            pl.BlockSpec((D, hp), lambda i: (0, 0)),              # w1: VMEM-resident
            pl.BlockSpec((1, hp), lambda i: (0, 0)),              # b1: VMEM-resident
            pl.BlockSpec((1, hp), lambda i: (0, 0)),              # w2 row: VMEM-resident
            pl.BlockSpec(memory_space=pltpu.MemorySpace.SMEM),    # b2: scalar in SMEM
        ],
        out_specs=pl.BlockSpec((1, tile_b), lambda i: (0, i)),    # lane-dense out slab
        compiler_params=pltpu.CompilerParams(
            dimension_semantics=("parallel",)),                   # megacore sharding
        cost_estimate=pl.CostEstimate(
            flops=flops, transcendentals=0, bytes_accessed=bytes_accessed),
    )(x_bf, w1p, b1p, w2p, b2)

    # (1, b_pad) slab -> (B, 1); columns >= B (ragged-tile garbage) are dropped.
    return out_row[0, :B].reshape(B, 1)


if __name__ == "__main__":
    # Small shapes consistent with the module; B=500 exercises tiling (2 tiles of
    # 256) plus the ragged-last-block path. input_size=16, hidden_size=32.
    B, D, H = 500, 16, 32

    key = jax.random.PRNGKey(0)
    kx, kw1, kb1, kw2, kb2 = jax.random.split(key, 5)

    x = jax.random.normal(kx, (B, D), dtype=jnp.float32)

    # Deterministic parameter init (PyTorch Linear default: U(-1/sqrt(fan_in), 1/sqrt(fan_in)))
    lim1 = 1.0 / (D ** 0.5)
    lim2 = 1.0 / (H ** 0.5)
    w1 = jax.random.uniform(kw1, (D, H), minval=-lim1, maxval=lim1, dtype=jnp.float32)
    b1 = jax.random.uniform(kb1, (1, H), minval=-lim1, maxval=lim1, dtype=jnp.float32)
    w2 = jax.random.uniform(kw2, (H, 1), minval=-lim2, maxval=lim2, dtype=jnp.float32)
    b2 = jax.random.uniform(kb2, (1, 1), minval=-lim2, maxval=lim2, dtype=jnp.float32)

    out = regression_nn_forward(x, w1, b1, w2, b2)
    out = jax.block_until_ready(out)
    assert out.shape == (B, 1)

    # Reference 1: same bf16-quantized fc1 inputs, f32 accumulate -> tight check of
    # the kernel's exact semantics.
    xq = x.astype(jnp.bfloat16)
    w1q = w1.astype(jnp.bfloat16)
    h_ref = jnp.maximum(jnp.dot(xq, w1q, preferred_element_type=jnp.float32) + b1, 0.0)
    ref_q = h_ref @ w2 + b2
    assert jnp.allclose(out, ref_q, atol=1e-4, rtol=1e-4), \
        float(jnp.max(jnp.abs(out - ref_q)))

    # Reference 2: full-f32 module semantics (eval-mode dropout == identity);
    # loose tolerance accounts for the deliberate bf16 input quantization.
    ref_f32 = jnp.maximum(x @ w1 + b1, 0.0) @ w2 + b2
    assert jnp.allclose(out, ref_f32, atol=5e-2, rtol=5e-2), \
        float(jnp.max(jnp.abs(out - ref_f32)))

    print("KERNEL_OK")
</pallas_src>

<mosaic_0001>
module attributes {stable_mosaic.version = 11 : i64} {
  func.func @mlp_kernel(%arg0: i32, %arg1: memref<256x16xbf16, #tpu.memory_space<vmem>>, %arg2: memref<16x128xbf16, #tpu.memory_space<vmem>>, %arg3: memref<1x128xf32, #tpu.memory_space<vmem>>, %arg4: memref<1x128xf32, #tpu.memory_space<vmem>>, %arg5: memref<1x1xf32, #tpu.memory_space<smem>>, %arg6: memref<1x256xf32, #tpu.memory_space<vmem>>) attributes {dimension_semantics = [#tpu.dimension_semantics<parallel>], iteration_bounds = array<i64: 2>, scalar_prefetch = 0 : i64, scratch_operands = 0 : i64, tpu.core_type = #tpu.core_type<tc>, window_params = [{transform_indices = @transform_0, window_bounds = array<i64: 256, 16>}, {pipeline_mode = #tpu.pipeline_mode<synchronous>, transform_indices = @transform_1, window_bounds = array<i64: 16, 128>}, {pipeline_mode = #tpu.pipeline_mode<synchronous>, transform_indices = @transform_2, window_bounds = array<i64: 1, 128>}, {pipeline_mode = #tpu.pipeline_mode<synchronous>, transform_indices = @transform_3, window_bounds = array<i64: 1, 128>}, {transform_indices = @transform_4, window_bounds = array<i64: 1, 1>}, {transform_indices = @transform_5, window_bounds = array<i64: 1, 256>}]} {
    %c0 = arith.constant 0 : index
    %c0_0 = arith.constant 0 : index
    %0 = vector.load %arg1[%c0, %c0_0] : memref<256x16xbf16, #tpu.memory_space<vmem>>, vector<256x16xbf16>
    %c0_1 = arith.constant 0 : index
    %c0_2 = arith.constant 0 : index
    %1 = vector.load %arg2[%c0_1, %c0_2] : memref<16x128xbf16, #tpu.memory_space<vmem>>, vector<16x128xbf16>
    %cst = arith.constant dense<0.000000e+00> : vector<256x128xf32>
    %2 = tpu.matmul %0, %1, %cst {dimension_numbers = #tpu.dot_dimension_numbers<[1], [0], [0], [1], [0, 0, 1, 1], [], []>} : vector<256x16xbf16>, vector<16x128xbf16>, vector<256x128xf32> -> vector<256x128xf32>
    %c0_3 = arith.constant 0 : index
    %c0_4 = arith.constant 0 : index
    %3 = vector.load %arg3[%c0_3, %c0_4] : memref<1x128xf32, #tpu.memory_space<vmem>>, vector<1x128xf32>
    %4 = vector.broadcast %3 : vector<1x128xf32> to vector<256x128xf32>
    %5 = arith.addf %2, %4 : vector<256x128xf32>
    %cst_5 = arith.constant 0.000000e+00 : f32
    %6 = vector.broadcast %cst_5 : f32 to vector<256x128xf32>
    %7 = arith.maximumf %5, %6 : vector<256x128xf32>
    %c0_6 = arith.constant 0 : index
    %c0_7 = arith.constant 0 : index
    %8 = vector.load %arg4[%c0_6, %c0_7] : memref<1x128xf32, #tpu.memory_space<vmem>>, vector<1x128xf32>
    %cst_8 = arith.constant dense<0.000000e+00> : vector<1x256xf32>
    %9 = tpu.matmul %8, %7, %cst_8 {dimension_numbers = #tpu.dot_dimension_numbers<[1], [1], [0], [0], [0, 0, 1, 0], [], []>} : vector<1x128xf32>, vector<256x128xf32>, vector<1x256xf32> -> vector<1x256xf32>
    %c0_9 = arith.constant 0 : index
    %c0_10 = arith.constant 0 : index
    %10 = memref.load %arg5[%c0_9, %c0_10] : memref<1x1xf32, #tpu.memory_space<smem>>
    %11 = vector.broadcast %10 : f32 to vector<1x256xf32>
    %12 = arith.addf %9, %11 : vector<1x256xf32>
    %c0_11 = arith.constant 0 : index
    %c0_12 = arith.constant 0 : index
    %13 = vector.load %arg6[%c0_11, %c0_12] : memref<1x256xf32, #tpu.memory_space<vmem>>, vector<1x256xf32>
    tpu.vector_store %arg6[%c0_11, %c0_12], %12 {strides = array<i32>} : memref<1x256xf32, #tpu.memory_space<vmem>>, vector<1x256xf32>,
    return
  }
  func.func @transform_0(%arg0: i32) -> (i32, i32) {
    %c0_i32 = arith.constant 0 : i32
    %c0_i32_0 = arith.constant 0 : i32
    return %arg0, %c0_i32 : i32, i32
  }
  func.func @transform_1(%arg0: i32) -> (i32, i32) {
    %c0_i32 = arith.constant 0 : i32
    %c0_i32_0 = arith.constant 0 : i32
    %c0_i32_1 = arith.constant 0 : i32
    return %c0_i32, %c0_i32_0 : i32, i32
  }
  func.func @transform_2(%arg0: i32) -> (i32, i32) {
    %c0_i32 = arith.constant 0 : i32
    %c0_i32_0 = arith.constant 0 : i32
    %c0_i32_1 = arith.constant 0 : i32
    return %c0_i32, %c0_i32_0 : i32, i32
  }
  func.func @transform_3(%arg0: i32) -> (i32, i32) {
    %c0_i32 = arith.constant 0 : i32
    %c0_i32_0 = arith.constant 0 : i32
    %c0_i32_1 = arith.constant 0 : i32
    return %c0_i32, %c0_i32_0 : i32, i32
  }
  func.func @transform_4(%arg0: i32) -> (i32, i32) {
    %c0_i32 = arith.constant 0 : i32
    %c0_i32_0 = arith.constant 0 : i32
    %c0_i32_1 = arith.constant 0 : i32
    return %c0_i32, %c0_i32_0 : i32, i32
  }
  func.func @transform_5(%arg0: i32) -> (i32, i32) {
    %c0_i32 = arith.constant 0 : i32
    %c0_i32_0 = arith.constant 0 : i32
    return %c0_i32, %arg0 : i32, i32
  }
}

</mosaic_0001>

<llo_original>
// kernel: tpu_custom_call.1
$region0: #{tpu_custom_call.1}
  #allocation0 [shape = 'u32[]', space=smem, size = 0x4, offset = 0x4, fixed_abs, tag = 'smem constant byte address 0x4 - core index']
  #allocation1 [shape = 'u32[144,128]{1,0:T(1,128)}', space=vmem, size = 0x12000, scoped, tag = 'internal scratch']
  #allocation2 [shape = 'f32[1,1]{1,0:T(1,128)S(6)}', space=smem, size = 0x200, scoped, tag = 'scoped memory for tpu_custom_call.1']
  %s0 = inlined_call_operand.vmem [shape: bf16[500,16], index: 0, kind: input, shape index: {}]
  %s1 = inlined_call_operand.vmem [shape: bf16[16,128], index: 1, kind: input, shape index: {}]
  %s2 = inlined_call_operand.vmem [shape: f32[1,128], index: 2, kind: input, shape index: {}]
  %s3 = inlined_call_operand.vmem [shape: f32[1,128], index: 3, kind: input, shape index: {}]
  %s4 = inlined_call_operand.<no memory space> [shape: f32[1,1], index: 4, kind: input, shape index: {}]
  %s5 = inlined_call_operand.hbm [shape: f32[1,512], index: 5, kind: output, shape index: {}]
  %s6 = sld [smem:[#allocation0]]
  $region53: #{tpu_custom_call.1} parent=0
    _
  %s8 = ssub.s32 1, %s6
  %s9 = scalar_select 0, %s8, %s6
  %10 = sst [smem:[#allocation2]] %s4
  $region1: #{tpu_custom_call.1} parent=0
    #allocation3 [shape = 'u8[2048]{0}', space=vmem, size = 0x800, scoped, tag = 'output window, operand 0']
    #allocation4 [shape = 's32[2]{0}', space=sflag, size = 0x8, scoped, tag = 'scoped memory for tpu_custom_call.1']
    %11 = vsyncpa [#allocation4], 0
    %s12 = scalar_lea.sflag [#allocation4], 1
    %13 = vsyncpa %s12, 0
    loop: start=0, step=1, limit=4
    $region2: #{tpu_custom_call.1} parent=1 // loop_pre_header
      _
    $region3: #{tpu_custom_call.1} parent=1 // loop_header
      %s15 = sphi 0, %s19
      %p16 = scmp.ge.s32.totalorder %s15, 4
      %s25 = sphi 0, %s27
      %s28 = sphi 0, %s25
      %s29 = sphi 0, %s28
      %s45 = sphi 0, %s29
      %s49 = sphi 0, %s49
      %s51 = sphi 0, %s49
      %s52 = sphi 0, %s51
      %s66 = sphi 0, %s52
      %s70 = sphi 0, %s70
      %s72 = sphi 0, %s70
      %s73 = sphi 0, %s72
      %s87 = sphi 0, %s73
      %s91 = sphi 0, %s91
      %s93 = sphi 0, %s91
      %s94 = sphi 0, %s93
      %s108 = sphi 0, %s94
      %s112 = sphi 0, %s112
      %s114 = sphi 0, %s112
      %s115 = sphi 0, %s114
      %s129 = sphi 0, %s115
      %s135 = sphi 0, %s137
      %s138 = sphi 0, %s135
      %s139 = sphi 0, %s138
      %s155 = sphi 0, %s139
    $region4: #{tpu_custom_call.1} parent=1 // loop_header_branch
      %18 = sbr.rel (%p16) target = $region8
    $region5: #{tpu_custom_call.1} parent=1 // loop_body
      %s20 = ssub.s32 %s15, 1
      %s21 = ssub.s32 %s15, 2
      %s22 = sadd.s32 %s15, 1
      %s23 = ssub.s32 %s15, %s22
      %p24 = scmp.eq.s32.totalorder %s23, 0
      %s26 = sadd.s32 %s25, 1
      %s27 = scalar_select %p24, %s25, %s26
      %p30 = pneg %p24
      %p31 = scmp.eq.s32.totalorder %s15, 1
      %p32 = por %p30, %p31
      %p33 = scmp.ne.s32.totalorder %s25, %s28
      %p34 = scmp.eq.s32.totalorder %s15, 0
      %p35 = por %p33, %p34
      %p36 = scmp.ne.s32.totalorder %s25, %s28
      %p37 = scmp.eq.s32.totalorder %s20, 1
      %p38 = por %p36, %p37
      %p39 = scmp.ne.s32.totalorder %s28, %s29
      %p40 = scmp.eq.s32.totalorder %s20, 0
      %p41 = por %p39, %p40
      %p42 = scmp.ne.s32.totalorder %s28, %s29
      %p43 = scmp.eq.s32.totalorder %s21, 1
      %p44 = por %p42, %p43
      %p46 = scmp.ne.s32.totalorder %s29, %s45
      %p47 = scmp.eq.s32.totalorder %s21, 0
      %p48 = por %p46, %p47
      %s50 = sadd.s32 %s49, 1
      %p53 = scmp.eq.s32.totalorder %s15, 1
      %p54 = scmp.ne.s32.totalorder %s49, %s51
      %p55 = scmp.eq.s32.totalorder %s15, 0
      %p56 = por %p54, %p55
      %p57 = scmp.ne.s32.totalorder %s49, %s51
      %p58 = scmp.eq.s32.totalorder %s20, 1
      %p59 = por %p57, %p58
      %p60 = scmp.ne.s32.totalorder %s51, %s52
      %p61 = scmp.eq.s32.totalorder %s20, 0
      %p62 = por %p60, %p61
      %p63 = scmp.ne.s32.totalorder %s51, %s52
      %p64 = scmp.eq.s32.totalorder %s21, 1
      %p65 = por %p63, %p64
      %p67 = scmp.ne.s32.totalorder %s52, %s66
      %p68 = scmp.eq.s32.totalorder %s21, 0
      %p69 = por %p67, %p68
      %s71 = sadd.s32 %s70, 1
      %p74 = scmp.eq.s32.totalorder %s15, 1
      %p75 = scmp.ne.s32.totalorder %s70, %s72
      %p76 = scmp.eq.s32.totalorder %s15, 0
      %p77 = por %p75, %p76
      %p78 = scmp.ne.s32.totalorder %s70, %s72
      %p79 = scmp.eq.s32.totalorder %s20, 1
      %p80 = por %p78, %p79
      %p81 = scmp.ne.s32.totalorder %s72, %s73
      %p82 = scmp.eq.s32.totalorder %s20, 0
      %p83 = por %p81, %p82
      %p84 = scmp.ne.s32.totalorder %s72, %s73
      %p85 = scmp.eq.s32.totalorder %s21, 1
      %p86 = por %p84, %p85
      %p88 = scmp.ne.s32.totalorder %s73, %s87
      %p89 = scmp.eq.s32.totalorder %s21, 0
      %p90 = por %p88, %p89
      %s92 = sadd.s32 %s91, 1
      %p95 = scmp.eq.s32.totalorder %s15, 1
      %p96 = scmp.ne.s32.totalorder %s91, %s93
      %p97 = scmp.eq.s32.totalorder %s15, 0
      %p98 = por %p96, %p97
      %p99 = scmp.ne.s32.totalorder %s91, %s93
      %p100 = scmp.eq.s32.totalorder %s20, 1
      %p101 = por %p99, %p100
      %p102 = scmp.ne.s32.totalorder %s93, %s94
      %p103 = scmp.eq.s32.totalorder %s20, 0
      %p104 = por %p102, %p103
      %p105 = scmp.ne.s32.totalorder %s93, %s94
      %p106 = scmp.eq.s32.totalorder %s21, 1
      %p107 = por %p105, %p106
      %p109 = scmp.ne.s32.totalorder %s94, %s108
      %p110 = scmp.eq.s32.totalorder %s21, 0
      %p111 = por %p109, %p110
      %s113 = sadd.s32 %s112, 1
      %p116 = scmp.eq.s32.totalorder %s15, 1
      %p117 = scmp.ne.s32.totalorder %s112, %s114
      %p118 = scmp.eq.s32.totalorder %s15, 0
      %p119 = por %p117, %p118
      %p120 = scmp.ne.s32.totalorder %s112, %s114
      %p121 = scmp.eq.s32.totalorder %s20, 1
      %p122 = por %p120, %p121
      %p123 = scmp.ne.s32.totalorder %s114, %s115
      %p124 = scmp.eq.s32.totalorder %s20, 0
      %p125 = por %p123, %p124
      %p126 = scmp.ne.s32.totalorder %s114, %s115
      %p127 = scmp.eq.s32.totalorder %s21, 1
      %p128 = por %p126, %p127
      %p130 = scmp.ne.s32.totalorder %s115, %s129
      %p131 = scmp.eq.s32.totalorder %s21, 0
      %p132 = por %p130, %p131
      %s133 = ssub.s32 %s15, %s22
      %p134 = scmp.eq.s32.totalorder %s133, 0
      %s136 = sadd.s32 %s135, 1
      %s137 = scalar_select %p134, %s135, %s136
      %p140 = pneg %p134
      %p141 = scmp.eq.s32.totalorder %s15, 1
      %p142 = por %p140, %p141
      %p143 = scmp.ne.s32.totalorder %s135, %s138
      %p144 = scmp.eq.s32.totalorder %s15, 0
      %p145 = por %p143, %p144
      %p146 = scmp.ne.s32.totalorder %s135, %s138
      %p147 = scmp.eq.s32.totalorder %s20, 1
      %p148 = por %p146, %p147
      %p149 = scmp.ne.s32.totalorder %s138, %s139
      %p150 = scmp.eq.s32.totalorder %s20, 0
      %p151 = por %p149, %p150
      %p152 = scmp.ne.s32.totalorder %s138, %s139
      %p153 = scmp.eq.s32.totalorder %s21, 1
      %p154 = por %p152, %p153
      %p156 = scmp.ne.s32.totalorder %s139, %s155
      %p157 = scmp.eq.s32.totalorder %s21, 0
      %p158 = por %p156, %p157
      %p159 = scmp.le.s32.totalorder 1, %s15
      %p160 = scmp.lt.s32.totalorder %s15, 3
      %p161 = pnand %p159, %p160
      %p162 = pneg %p161
      // Predicated region
      $region9: #{tpu_custom_call.1} parent=5 // pred_check
        _
      $region10: #{tpu_custom_call.1} parent=5 // pred_check_branch
        %164 = sbr.rel (%p161) target = $region12
      $region11: #{tpu_custom_call.1} parent=5 // pred_region
        %s165 = ssub.s32 %s15, 1
        // Predicated region
        $region13: #{tpu_custom_call.1} parent=11 // pred_check
          %p166 = pneg %p62
        $region14: #{tpu_custom_call.1} parent=11 // pred_check_branch
          %168 = sbr.rel (%p166) target = $region16
        $region15: #{tpu_custom_call.1} parent=11 // pred_region
          _
        $region16: #{tpu_custom_call.1} parent=11 // pred_fallthru
          _
        // Predicated region
        $region17: #{tpu_custom_call.1} parent=11 // pred_check
          %p169 = pneg %p83
        $region18: #{tpu_custom_call.1} parent=11 // pred_check_branch
          %171 = sbr.rel (%p169) target = $region20
        $region19: #{tpu_custom_call.1} parent=11 // pred_region
          _
        $region20: #{tpu_custom_call.1} parent=11 // pred_fallthru
          _
        // Predicated region
        $region21: #{tpu_custom_call.1} parent=11 // pred_check
          %p172 = pneg %p104
        $region22: #{tpu_custom_call.1} parent=11 // pred_check_branch
          %174 = sbr.rel (%p172) target = $region24
        $region23: #{tpu_custom_call.1} parent=11 // pred_region
          _
        $region24: #{tpu_custom_call.1} parent=11 // pred_fallthru
          _
        // Predicated region
        $region25: #{tpu_custom_call.1} parent=11 // pred_check
          %p175 = pneg %p125
        $region26: #{tpu_custom_call.1} parent=11 // pred_check_branch
          %177 = sbr.rel (%p175) target = $region28
        $region27: #{tpu_custom_call.1} parent=11 // pred_region
          _
        $region28: #{tpu_custom_call.1} parent=11 // pred_fallthru
          _
      $region12: #{tpu_custom_call.1} parent=5 // pred_fallthru
        _
      %p178 = scmp.lt.s32.totalorder %s15, 2
      // Predicated region
      $region29: #{tpu_custom_call.1} parent=5 // pred_check
        %p179 = pneg %p178
      $region30: #{tpu_custom_call.1} parent=5 // pred_check_branch
        %181 = sbr.rel (%p179) target = $region32
      $region31: #{tpu_custom_call.1} parent=5 // pred_region
        // Predicated region
        $region33: #{tpu_custom_call.1} parent=31 // pred_check
          %p182 = pneg %p35
        $region34: #{tpu_custom_call.1} parent=31 // pred_check_branch
          %184 = sbr.rel (%p182) target = $region36
        $region35: #{tpu_custom_call.1} parent=31 // pred_region
          %s185 = smul.u32 32, %s15
          %s186 = ssub.s32 63, %s185
          %p187 = scmp.lt.s32.totalorder %s186, 32
          %s188 = scalar_select %p187, %s186, 32
          %s189 = smul.u32 64, %s188
          %p190 = scmp.lt.s32.totalorder %s185, 62
          %s191 = scalar_select %p190, %s185, 62
          %s192 = smul.addr %s191, 4
          %s193 = scalar_lea.vmem %s0, %s192
          %s194 = smul.u32 32, %s15
          %s195 = ssub.s32 63, %s194
          %p196 = scmp.lt.s32.totalorder %s195, 32
          %s197 = scalar_select %p196, %s195, 32
          %s198 = smul.u32 64, %s197
        $region36: #{tpu_custom_call.1} parent=31 // pred_fallthru
          _
      $region32: #{tpu_custom_call.1} parent=5 // pred_fallthru
        _
      %p199 = scmp.le.s32.totalorder 1, %s15
      %p200 = scmp.lt.s32.totalorder %s15, 3
      %p201 = pnand %p199, %p200
      %p202 = pneg %p201
      // Predicated region
      $region37: #{tpu_custom_call.1} parent=5 // pred_check
        _
      $region38: #{tpu_custom_call.1} parent=5 // pred_check_branch
        %204 = sbr.rel (%p201) target = $region40
      $region39: #{tpu_custom_call.1} parent=5 // pred_region
        %s205 = ssub.s32 %s15, 1
        %s206 = smul.u32 32, %s20
        %s207 = ssub.s32 63, %s206
        %p208 = scmp.lt.s32.totalorder %s207, 32
        %s209 = scalar_select %p208, %s207, 32
        %s210 = smul.u32 64, %s209
        %p211 = scmp.lt.s32.totalorder %s206, 62
        %s212 = scalar_select %p211, %s206, 62
        %s213 = smul.addr %s212, 4
        %s214 = scalar_lea.vmem %s0, %s213
        %p215 = pneg %p41
        %p216 = pneg %p38
        %p217 = pneg %p62
        %p218 = pneg %p59
        %p219 = pneg %p83
        %p220 = pneg %p80
        %p221 = pneg %p104
        %p222 = pneg %p101
        %p223 = pneg %p125
        %p224 = pneg %p122
        %p225 = pneg %p151
        %p226 = pneg %p148
        %s227 = sand.u32 %s138, 1
        %s228 = scalar_lea.sflag [#allocation4], %s227
        %s229 = sand.u32 %s138, 1
        %s230 = smul.addr %s229, 2
        %s231 = scalar_lea.vmem [#allocation3], %s230
        %s232 = smul.u32 32, %s20
        %s233 = ssub.s32 63, %s232
        %p234 = scmp.lt.s32.totalorder %s233, 32
        %s235 = scalar_select %p234, %s233, 32
        %s236 = smul.u32 64, %s235
        %p237 = scmp.lt.s32.totalorder %s232, 62
        %s238 = scalar_select %p237, %s232, 62
        %s239 = smul.addr %s238, 4
        %s240 = scalar_lea.vmem %s0, %s239
        %s241 = smul.u32 32, %s20
        %s242 = ssub.s32 63, %s241
        %p243 = scmp.lt.s32.totalorder %s242, 32
        %s244 = scalar_select %p243, %s242, 32
        %s245 = smul.u32 64, %s244
        %s246 = smul.u32 2, %s20
        %v248 = vld [vmem:[%s240] sm:$0xf]
        %v249 = vld [vmem:[%s240 + $0x4] sm:$0xf]
        %v250 = vld [vmem:[%s240 + $0x8] sm:$0xf]
        %v251 = vld [vmem:[%s240 + $0xc] sm:$0xf]
        %v252 = vld [vmem:[%s240 + $0x10] sm:$0xf]
        %v253 = vld [vmem:[%s240 + $0x14] sm:$0xf]
        %v254 = vld [vmem:[%s240 + $0x18] sm:$0xf]
        %v255 = vld [vmem:[%s240 + $0x1c] sm:$0xf]
        %v256 = vld [vmem:[%s240 + $0x20] sm:$0xf]
        %v257 = vld [vmem:[%s240 + $0x24] sm:$0xf]
        %v258 = vld [vmem:[%s240 + $0x28] sm:$0xf]
        %v259 = vld [vmem:[%s240 + $0x2c] sm:$0xf]
        %v260 = vld [vmem:[%s240 + $0x30] sm:$0xf]
        %v261 = vld [vmem:[%s240 + $0x34] sm:$0xf]
        %v262 = vld [vmem:[%s240 + $0x38] sm:$0xf]
        %v263 = vld [vmem:[%s240 + $0x3c] sm:$0xf]
        %v264 = vld [vmem:[%s240 + $0x40] sm:$0xf]
        %v265 = vld [vmem:[%s240 + $0x44] sm:$0xf]
        %v266 = vld [vmem:[%s240 + $0x48] sm:$0xf]
        %v267 = vld [vmem:[%s240 + $0x4c] sm:$0xf]
        %v268 = vld [vmem:[%s240 + $0x50] sm:$0xf]
        %v269 = vld [vmem:[%s240 + $0x54] sm:$0xf]
        %v270 = vld [vmem:[%s240 + $0x58] sm:$0xf]
        %v271 = vld [vmem:[%s240 + $0x5c] sm:$0xf]
        %v272 = vld [vmem:[%s240 + $0x60] sm:$0xf]
        %v273 = vld [vmem:[%s240 + $0x64] sm:$0xf]
        %v274 = vld [vmem:[%s240 + $0x68] sm:$0xf]
        %v275 = vld [vmem:[%s240 + $0x6c] sm:$0xf]
        %v276 = vld [vmem:[%s240 + $0x70] sm:$0xf]
        %v277 = vld [vmem:[%s240 + $0x74] sm:$0xf]
        %v278 = vld [vmem:[%s240 + $0x78] sm:$0xf]
        %v279 = vld [vmem:[%s240 + $0x7c] sm:$0xf]
        %v280 = vld [vmem:[%s1] sm:$0xf]
        %v281 = vld [vmem:[%s1 + $0x4] sm:$0xf]
        %v282 = vld [vmem:[%s2] sm:$0x1]
        %v284 = vlaneseq
        %v285 = vshrl.u32 %v284, 7
        %v286 = vsub.s32 0, %v285
        %v287 = vrot.slane %v282, %v286
        %v321 = vunpack.c.l.b16 %v248
        %v322 = vunpack.c.l.b16 %v249
        %v323 = vunpack.c.l.b16 %v250
        %v324 = vunpack.c.l.b16 %v251
        %v325 = vunpack.c.l.b16 %v252
        %v326 = vunpack.c.l.b16 %v253
        %v327 = vunpack.c.l.b16 %v254
        %v328 = vunpack.c.l.b16 %v255
        %v329 = vunpack.c.l.b16 %v256
        %v330 = vunpack.c.l.b16 %v257
        %v331 = vunpack.c.l.b16 %v258
        %v332 = vunpack.c.l.b16 %v259
        %v333 = vunpack.c.l.b16 %v260
        %v334 = vunpack.c.l.b16 %v261
        %v335 = vunpack.c.l.b16 %v262
        %v336 = vunpack.c.l.b16 %v263
        %v337 = vunpack.c.l.b16 %v264
        %v338 = vunpack.c.l.b16 %v265
        %v339 = vunpack.c.l.b16 %v266
        %v340 = vunpack.c.l.b16 %v267
        %v341 = vunpack.c.l.b16 %v268
        %v342 = vunpack.c.l.b16 %v269
        %v343 = vunpack.c.l.b16 %v270
        %v344 = vunpack.c.l.b16 %v271
        %v345 = vunpack.c.l.b16 %v272
        %v346 = vunpack.c.l.b16 %v273
        %v347 = vunpack.c.l.b16 %v274
        %v348 = vunpack.c.l.b16 %v275
        %v349 = vunpack.c.l.b16 %v276
        %v350 = vunpack.c.l.b16 %v277
        %v351 = vunpack.c.l.b16 %v278
        %v352 = vunpack.c.l.b16 %v279
        %v353 = vpack.c.b16 %v322, %v321
        %v354 = vpack.c.b16 %v324, %v323
        %v355 = vpack.c.b16 %v326, %v325
        %v356 = vpack.c.b16 %v328, %v327
        %v357 = vpack.c.b16 %v330, %v329
        %v358 = vpack.c.b16 %v332, %v331
        %v359 = vpack.c.b16 %v334, %v333
        %v360 = vpack.c.b16 %v336, %v335
        %v361 = vpack.c.b16 %v338, %v337
        %v362 = vpack.c.b16 %v340, %v339
        %v363 = vpack.c.b16 %v342, %v341
        %v364 = vpack.c.b16 %v344, %v343
        %v365 = vpack.c.b16 %v346, %v345
        %v366 = vpack.c.b16 %v348, %v347
        %v367 = vpack.c.b16 %v350, %v349
        %v368 = vpack.c.b16 %v352, %v351
        %v371 = vunpack.c.l.b16 %v280
        %v372 = vunpack.c.l.b16 %v281
        %v373 = vpack.c.b16 %v372, %v371
        %vm375 = vcmask 130048
        %v377 = vsel %vm375, %v353, 0
        %v380 = vsel %vm375, %v354, 0
        %v383 = vsel %vm375, %v355, 0
        %v386 = vsel %vm375, %v356, 0
        %v389 = vsel %vm375, %v357, 0
        %v392 = vsel %vm375, %v358, 0
        %v395 = vsel %vm375, %v359, 0
        %v398 = vsel %vm375, %v360, 0
        %v401 = vsel %vm375, %v361, 0
        %v404 = vsel %vm375, %v362, 0
        %v407 = vsel %vm375, %v363, 0
        %v410 = vsel %vm375, %v364, 0
        %v413 = vsel %vm375, %v365, 0
        %v416 = vsel %vm375, %v366, 0
        %v419 = vsel %vm375, %v367, 0
        %v422 = vsel %vm375, %v368, 0
        %424 = vmatprep.subr.bf16.mxu0 0
        %425 = vmatpush1.bf16.msra.mxu0 %v373
        %426 = vmatprep.subr.bf16.mxu0 0
        %427 = vmatpush1.bf16.msra.mxu0 0
        %428 = vmatprep.subr.bf16.mxu0 0
        %429 = vmatpush1.bf16.msra.mxu0 0
        %430 = vmatprep.subr.bf16.mxu0 0
        %431 = vmatpush1.bf16.msra.mxu0 0
        %432 = vmatprep.subr.bf16.mxu0 0
        %433 = vmatpush1.bf16.msra.mxu0 0
        %434 = vmatprep.subr.bf16.mxu0 0
        %435 = vmatpush1.bf16.msra.mxu0 0
        %436 = vmatprep.subr.bf16.mxu0 0
        %437 = vmatpush1.bf16.msra.mxu0 0
        %438 = vmatprep.subr.bf16.mxu0 0
        %439 = vmatpush1.bf16.msra.mxu0 0
        %440 = vmatprep.subr.bf16.mxu0 0
        %441 = vmatpush1.bf16.msra.mxu0 0
        %442 = vmatprep.subr.bf16.mxu0 0
        %443 = vmatpush1.bf16.msra.mxu0 0
        %444 = vmatprep.subr.bf16.mxu0 0
        %445 = vmatpush1.bf16.msra.mxu0 0
        %446 = vmatprep.subr.bf16.mxu0 0
        %447 = vmatpush1.bf16.msra.mxu0 0
        %448 = vmatprep.subr.bf16.mxu0 0
        %449 = vmatpush1.bf16.msra.mxu0 0
        %450 = vmatprep.subr.bf16.mxu0 0
        %451 = vmatpush1.bf16.msra.mxu0 0
        %452 = vmatprep.subr.bf16.mxu0 0
        %453 = vmatpush1.bf16.msra.mxu0 0
        %454 = vmatprep.subr.bf16.mxu0 0
        %455 = vmatpush1.bf16.msra.mxu0 0
        %456 = vmatprep.mubr.bf16.mxu0 0
        %457 = vmatmul.mubr.bf16.gmra.mrb[0].mxu0 %v377
        %v458 = vpop.f32.mrb[0].mxu0
        %v459 = vadd.f32 %v287, %v458
        %v460 = vpop.f32.mrb[0].mxu0
        %v461 = vpop.f32.mrb[0].mxu0
        %v462 = vadd.f32 %v287, %v461
        %v463 = vpop.f32.mrb[0].mxu0
        %464 = vmatprep.mubr.bf16.mxu0 0
        %465 = vmatmul.mubr.bf16.gmra.mrb[0].mxu0 %v380
        %v466 = vpop.f32.mrb[0].mxu0
        %v467 = vadd.f32 %v287, %v466
        %v468 = vpop.f32.mrb[0].mxu0
        %v469 = vpop.f32.mrb[0].mxu0
        %v470 = vadd.f32 %v287, %v469
        %v471 = vpop.f32.mrb[0].mxu0
        %472 = vmatprep.mubr.bf16.mxu0 0
        %473 = vmatmul.mubr.bf16.gmra.mrb[0].mxu0 %v383
        %v474 = vpop.f32.mrb[0].mxu0
        %v475 = vadd.f32 %v287, %v474
        %v476 = vpop.f32.mrb[0].mxu0
        %v477 = vpop.f32.mrb[0].mxu0
        %v478 = vadd.f32 %v287, %v477
        %v479 = vpop.f32.mrb[0].mxu0
        %480 = vmatprep.mubr.bf16.mxu0 0
        %481 = vmatmul.mubr.bf16.gmra.mrb[0].mxu0 %v386
        %v482 = vpop.f32.mrb[0].mxu0
        %v483 = vadd.f32 %v287, %v482
        %v484 = vpop.f32.mrb[0].mxu0
        %v485 = vpop.f32.mrb[0].mxu0
        %v486 = vadd.f32 %v287, %v485
        %v487 = vpop.f32.mrb[0].mxu0
        %488 = vmatprep.mubr.bf16.mxu0 0
        %489 = vmatmul.mubr.bf16.gmra.mrb[0].mxu0 %v389
        %v490 = vpop.f32.mrb[0].mxu0
        %v491 = vadd.f32 %v287, %v490
        %v492 = vpop.f32.mrb[0].mxu0
        %v493 = vpop.f32.mrb[0].mxu0
        %v494 = vadd.f32 %v287, %v493
        %v495 = vpop.f32.mrb[0].mxu0
        %496 = vmatprep.mubr.bf16.mxu0 0
        %497 = vmatmul.mubr.bf16.gmra.mrb[0].mxu0 %v392
        %v498 = vpop.f32.mrb[0].mxu0
        %v499 = vadd.f32 %v287, %v498
        %v500 = vpop.f32.mrb[0].mxu0
        %v501 = vpop.f32.mrb[0].mxu0
        %v502 = vadd.f32 %v287, %v501
        %v503 = vpop.f32.mrb[0].mxu0
        %504 = vmatprep.mubr.bf16.mxu0 0
        %505 = vmatmul.mubr.bf16.gmra.mrb[0].mxu0 %v395
        %v506 = vpop.f32.mrb[0].mxu0
        %v507 = vadd.f32 %v287, %v506
        %v508 = vpop.f32.mrb[0].mxu0
        %v509 = vpop.f32.mrb[0].mxu0
        %v510 = vadd.f32 %v287, %v509
        %v511 = vpop.f32.mrb[0].mxu0
        %512 = vmatprep.mubr.bf16.mxu0 0
        %513 = vmatmul.mubr.bf16.gmra.mrb[0].mxu0 %v398
        %v514 = vpop.f32.mrb[0].mxu0
        %v515 = vadd.f32 %v287, %v514
        %v516 = vpop.f32.mrb[0].mxu0
        %v517 = vpop.f32.mrb[0].mxu0
        %v518 = vadd.f32 %v287, %v517
        %v519 = vpop.f32.mrb[0].mxu0
        %520 = vmatprep.mubr.bf16.mxu0 0
        %521 = vmatmul.mubr.bf16.gmra.mrb[0].mxu0 %v401
        %v522 = vpop.f32.mrb[0].mxu0
        %v523 = vadd.f32 %v287, %v522
        %v524 = vpop.f32.mrb[0].mxu0
        %v525 = vpop.f32.mrb[0].mxu0
        %v526 = vadd.f32 %v287, %v525
        %v527 = vpop.f32.mrb[0].mxu0
        %528 = vmatprep.mubr.bf16.mxu0 0
        %529 = vmatmul.mubr.bf16.gmra.mrb[0].mxu0 %v404
        %v530 = vpop.f32.mrb[0].mxu0
        %v531 = vadd.f32 %v287, %v530
        %v532 = vpop.f32.mrb[0].mxu0
        %v533 = vpop.f32.mrb[0].mxu0
        %v534 = vadd.f32 %v287, %v533
        %v535 = vpop.f32.mrb[0].mxu0
        %536 = vmatprep.mubr.bf16.mxu0 0
        %537 = vmatmul.mubr.bf16.gmra.mrb[0].mxu0 %v407
        %v538 = vpop.f32.mrb[0].mxu0
        %v539 = vadd.f32 %v287, %v538
        %v540 = vpop.f32.mrb[0].mxu0
        %v541 = vpop.f32.mrb[0].mxu0
        %v542 = vadd.f32 %v287, %v541
        %v543 = vpop.f32.mrb[0].mxu0
        %544 = vmatprep.mubr.bf16.mxu0 0
        %545 = vmatmul.mubr.bf16.gmra.mrb[0].mxu0 %v410
        %v546 = vpop.f32.mrb[0].mxu0
        %v547 = vadd.f32 %v287, %v546
        %v548 = vpop.f32.mrb[0].mxu0
        %v549 = vpop.f32.mrb[0].mxu0
        %v550 = vadd.f32 %v287, %v549
        %v551 = vpop.f32.mrb[0].mxu0
        %552 = vmatprep.mubr.bf16.mxu0 0
        %553 = vmatmul.mubr.bf16.gmra.mrb[0].mxu0 %v413
        %v554 = vpop.f32.mrb[0].mxu0
        %v555 = vadd.f32 %v287, %v554
        %v556 = vpop.f32.mrb[0].mxu0
        %v557 = vpop.f32.mrb[0].mxu0
        %v558 = vadd.f32 %v287, %v557
        %v559 = vpop.f32.mrb[0].mxu0
        %560 = vmatprep.mubr.bf16.mxu0 0
        %561 = vmatmul.mubr.bf16.gmra.mrb[0].mxu0 %v416
        %v562 = vpop.f32.mrb[0].mxu0
        %v563 = vadd.f32 %v287, %v562
        %v564 = vpop.f32.mrb[0].mxu0
        %v565 = vpop.f32.mrb[0].mxu0
        %v566 = vadd.f32 %v287, %v565
        %v567 = vpop.f32.mrb[0].mxu0
        %568 = vmatprep.mubr.bf16.mxu0 0
        %569 = vmatmul.mubr.bf16.gmra.mrb[0].mxu0 %v419
        %v570 = vpop.f32.mrb[0].mxu0
        %v571 = vadd.f32 %v287, %v570
        %v572 = vpop.f32.mrb[0].mxu0
        %v573 = vpop.f32.mrb[0].mxu0
        %v574 = vadd.f32 %v287, %v573
        %v575 = vpop.f32.mrb[0].mxu0
        %576 = vmatprep.mubr.bf16.mxu0 0
        %577 = vmatmul.mubr.bf16.gmra.mrb[0].mxu0 %v422
        %v578 = vpop.f32.mrb[0].mxu0
        %v579 = vadd.f32 %v287, %v578
        %v580 = vpop.f32.mrb[0].mxu0
        %v581 = vpop.f32.mrb[0].mxu0
        %v582 = vadd.f32 %v287, %v581
        %v583 = vpop.f32.mrb[0].mxu0
        %584 = vdwg.mxu0
        %v585 = vmax.f32 %v459, 0.0
        %v586 = vmax.f32 %v462, 0.0
        %v587 = vmax.f32 %v467, 0.0
        %v588 = vmax.f32 %v470, 0.0
        %v589 = vmax.f32 %v475, 0.0
        %v590 = vmax.f32 %v478, 0.0
        %v591 = vmax.f32 %v483, 0.0
        %v592 = vmax.f32 %v486, 0.0
        %v593 = vmax.f32 %v491, 0.0
        %v594 = vmax.f32 %v494, 0.0
        %v595 = vmax.f32 %v499, 0.0
        %v596 = vmax.f32 %v502, 0.0
        %v597 = vmax.f32 %v507, 0.0
        %v598 = vmax.f32 %v510, 0.0
        %v599 = vmax.f32 %v515, 0.0
        %v600 = vmax.f32 %v518, 0.0
        %v601 = vmax.f32 %v523, 0.0
        %v602 = vmax.f32 %v526, 0.0
        %v603 = vmax.f32 %v531, 0.0
        %v604 = vmax.f32 %v534, 0.0
        %v605 = vmax.f32 %v539, 0.0
        %v606 = vmax.f32 %v542, 0.0
        %v607 = vmax.f32 %v547, 0.0
        %v608 = vmax.f32 %v550, 0.0
        %v609 = vmax.f32 %v555, 0.0
        %v610 = vmax.f32 %v558, 0.0
        %v611 = vmax.f32 %v563, 0.0
        %v612 = vmax.f32 %v566, 0.0
        %v613 = vmax.f32 %v571, 0.0
        %v614 = vmax.f32 %v574, 0.0
        %v615 = vmax.f32 %v579, 0.0
        %v616 = vmax.f32 %v582, 0.0
        %v617 = vld [vmem:[%s3] sm:$0x1]
        %s618 = sld [smem:[#allocation2]]
        %v619 = vstv %s618
        %620 = vmatprep.subr.mxu0 0.0
        %621 = vmatpush1.xpose.msra.mxu0 %v585
        %622 = vmatprep.subr.mxu0 0.0
        %623 = vmatpush1.xpose.msra.mxu0 %v586
        %624 = vmatprep.subr.mxu0 0.0
        %625 = vmatpush1.xpose.msra.mxu0 %v587
        %626 = vmatprep.subr.mxu0 0.0
        %627 = vmatpush1.xpose.msra.mxu0 %v588
        %628 = vmatprep.subr.mxu0 0.0
        %629 = vmatpush1.xpose.msra.mxu0 %v589
        %630 = vmatprep.subr.mxu0 0.0
        %631 = vmatpush1.xpose.msra.mxu0 %v590
        %632 = vmatprep.subr.mxu0 0.0
        %633 = vmatpush1.xpose.msra.mxu0 %v591
        %634 = vmatprep.subr.mxu0 0.0
        %635 = vmatpush1.xpose.msra.mxu0 %v592
        %636 = vmatprep.subr.mxu0 0.0
        %637 = vmatpush1.xpose.msra.mxu0 %v593
        %638 = vmatprep.subr.mxu0 0.0
        %639 = vmatpush1.xpose.msra.mxu0 %v594
        %640 = vmatprep.subr.mxu0 0.0
        %641 = vmatpush1.xpose.msra.mxu0 %v595
        %642 = vmatprep.subr.mxu0 0.0
        %643 = vmatpush1.xpose.msra.mxu0 %v596
        %644 = vmatprep.subr.mxu0 0.0
        %645 = vmatpush1.xpose.msra.mxu0 %v597
        %646 = vmatprep.subr.mxu0 0.0
        %647 = vmatpush1.xpose.msra.mxu0 %v598
        %648 = vmatprep.subr.mxu0 0.0
        %649 = vmatpush1.xpose.msra.mxu0 %v599
        %650 = vmatprep.subr.mxu0 0.0
        %651 = vmatpush1.xpose.msra.mxu0 %v600
        %652 = vmatprep.subr.mxu0 0.0
        %653 = vmatpush1.xpose.msra.mxu0 %v601
        %654 = vmatprep.subr.mxu0 0.0
        %655 = vmatpush1.xpose.msra.mxu0 %v602
        %656 = vmatprep.subr.mxu0 0.0
        %657 = vmatpush1.xpose.msra.mxu0 %v603
        %658 = vmatprep.subr.mxu0 0.0
        %659 = vmatpush1.xpose.msra.mxu0 %v604
        %660 = vmatprep.subr.mxu0 0.0
        %661 = vmatpush1.xpose.msra.mxu0 %v605
        %662 = vmatprep.subr.mxu0 0.0
        %663 = vmatpush1.xpose.msra.mxu0 %v606
        %664 = vmatprep.subr.mxu0 0.0
        %665 = vmatpush1.xpose.msra.mxu0 %v607
        %666 = vmatprep.subr.mxu0 0.0
        %667 = vmatpush1.xpose.msra.mxu0 %v608
        %668 = vmatprep.subr.mxu0 0.0
        %669 = vmatpush1.xpose.msra.mxu0 %v609
        %670 = vmatprep.subr.mxu0 0.0
        %671 = vmatpush1.xpose.msra.mxu0 %v610
        %672 = vmatprep.subr.mxu0 0.0
        %673 = vmatpush1.xpose.msra.mxu0 %v611
        %674 = vmatprep.subr.mxu0 0.0
        %675 = vmatpush1.xpose.msra.mxu0 %v612
        %676 = vmatprep.subr.mxu0 0.0
        %677 = vmatpush1.xpose.msra.mxu0 %v613
        %678 = vmatprep.subr.mxu0 0.0
        %679 = vmatpush1.xpose.msra.mxu0 %v614
        %680 = vmatprep.subr.mxu0 0.0
        %681 = vmatpush1.xpose.msra.mxu0 %v615
        %682 = vmatprep.subr.mxu0 0.0
        %683 = vmatpush1.xpose.msra.mxu0 %v616
        %684 = vmatprep.mubr.f32.mxu0 0.0
        %685 = vmatmul.mubr.f32.gmra.mrb[0].mxu0 %v617
        %v686 = vpop.f32.mrb[0].mxu0
        %v687 = vadd.f32 %v619, %v686
        %v688 = vpop.f32.mrb[0].mxu0
        %v689 = vadd.f32 %v619, %v688
        %690 = vdwg.mxu0
        %v693 = vcombine.low %v687, %v689
        %v695 = vunpack.c.l.s4 1966171168
        %v696 = vunpack.c.0.s8 %v695
        %v697 = vlaneseq
        %v698 = vshrl.u32 %v697, 7
        %v699 = vsub.s32 %v696, %v698
        %v700 = vrot.slane %v693, %v699
        %v702 = vunpack.c.l.s4 1966171168
        %v703 = vunpack.c.0.s8 %v702
        %v704 = vlaneseq
        %v705 = vshrl.u32 %v704, 7
        %v706 = vsub.s32 %v703, %v705
        %v707 = vrot.slane %v700, %v706
        %v709 = vlaneseq
        %vm710 = vcmp.ge.s32.totalorder %v709, 0
        %vm711 = vcmp.lt.s32.totalorder %v709, 256
        %vm712 = vmand %vm710, %vm711
        %713 = vst.msk [vmem:[%s231] sm:$0x3] %vm712, %v707
        %s714 = sand.u32 %s138, 1
        %s715 = scalar_lea.sflag [#allocation4], %s714
        %s716 = sand.u32 %s138, 1
        %s717 = smul.addr %s716, 2
        %s718 = scalar_lea.vmem [#allocation3], %s717
        // Predicated region
        $region41: #{tpu_custom_call.1} parent=39 // pred_check
          %p719 = pneg %p148
        $region42: #{tpu_custom_call.1} parent=39 // pred_check_branch
          %721 = sbr.rel (%p719) target = $region44
        $region43: #{tpu_custom_call.1} parent=39 // pred_region
          %s722 = smul.u32 2, %s20
          %s724 = ssub.s32 32, 32
          %725 = vsyncadd %s715, %s724
          %s726 = smul.addr %s722, 16
          %s727 = scalar_lea.hbm %s5, %s726
          %s729 = sshll.u32 %s718, 4
          %s730 = int_to_ptr.vmem [resolvable:$true] %s729
          %732 = dma.vmem_to_hbm [thread:$0]  %s730, 32, %s727, %s715
        $region44: #{tpu_custom_call.1} parent=39 // pred_fallthru
          _
      $region40: #{tpu_custom_call.1} parent=5 // pred_fallthru
        _
      %p733 = scmp.le.s32.totalorder 2, %s15
      // Predicated region
      $region45: #{tpu_custom_call.1} parent=5 // pred_check
        %p734 = pneg %p733
      $region46: #{tpu_custom_call.1} parent=5 // pred_check_branch
        %736 = sbr.rel (%p734) target = $region48
      $region47: #{tpu_custom_call.1} parent=5 // pred_region
        %s737 = ssub.s32 %s15, 2
        // Predicated region
        $region49: #{tpu_custom_call.1} parent=47 // pred_check
          %p738 = pneg %p154
        $region50: #{tpu_custom_call.1} parent=47 // pred_check_branch
          %740 = sbr.rel (%p738) target = $region52
        $region51: #{tpu_custom_call.1} parent=47 // pred_region
          %s741 = sand.u32 %s139, 1
          %s742 = scalar_lea.sflag [#allocation4], %s741
          %s743 = sand.u32 %s139, 1
          %s744 = smul.addr %s743, 2
          %s745 = scalar_lea.vmem [#allocation3], %s744
          %746 = dma.done %s742, 32
        $region52: #{tpu_custom_call.1} parent=47 // pred_fallthru
          _
      $region48: #{tpu_custom_call.1} parent=5 // pred_fallthru
        _
    $region6: #{tpu_custom_call.1} parent=1 // loop_footer
      %s19 = sadd.s32 1, %s15
    $region7: #{tpu_custom_call.1} parent=1 // loop_footer_branch
      %14 = sbr.rel target = $region3
    $region8: #{tpu_custom_call.1} parent=1 // loop_exit
      _
    %747 = vsyncpa [#allocation4], 1
    %s748 = scalar_lea.sflag [#allocation4], 1
    %749 = vsyncpa %s748, 1

</llo_original>
